<compile_context>
chip_gen: v7x
topology: tpu7x:2x2x1
jax: 0.10.0
libtpu: 0.0.40
codegen_flags: <defaults>
</compile_context>

<pallas_src>
import functools

import jax
import jax.numpy as jnp
from jax.experimental import pallas as pl
from jax.experimental.pallas import tpu as pltpu


def _round_up(x, m):
    return ((x + m - 1) // m) * m


def reversible_kernel(x_ref, wf_ref, bf_ref, wg_ref, bg_ref, out_ref,
                      x1_sc, x2_sc):
    d = pl.program_id(1)

    @pl.when(d == 0)
    def _():
        # cat([x, x], dim=-1) then chunk(2, dim=2)  ->  x1 = x, x2 = x
        x0 = x_ref[...].astype(jnp.float32)
        x1_sc[...] = x0
        x2_sc[...] = x0

    wf = wf_ref[...]          # (Dp, Dp) bf16
    bf = bf_ref[...]          # (1, Dp)  f32
    wg = wg_ref[...]          # (Dp, Dp) bf16
    bg = bg_ref[...]          # (1, Dp)  f32

    x1 = x1_sc[...]
    x2 = x2_sc[...]

    # y1 = x1 + f(x2)   (bf16 MXU operands, f32 accumulation / carry)
    y1 = x1 + jnp.dot(x2.astype(jnp.bfloat16), wf,
                      preferred_element_type=jnp.float32) + bf
    x1_sc[...] = y1

    # y2 = x2 + g(y1)
    y2 = x2 + jnp.dot(y1.astype(jnp.bfloat16), wg,
                      preferred_element_type=jnp.float32) + bg
    x2_sc[...] = y2

    @pl.when(d == pl.num_programs(1) - 1)
    def _():
        # stack(out.chunk(2, dim=-1)).mean(dim=0) == (y1 + y2) / 2
        out_ref[...] = ((y1 + y2) * 0.5).astype(out_ref.dtype)


@functools.partial(jax.jit, static_argnames=("tile_m",))
def reversible_sequence(x, wf, bf, wg, bg, *, tile_m=512):
    """x: (B, N, D); wf/wg: (depth, D, D); bf/bg: (depth, 1, D)."""
    B, N, D = x.shape
    depth = wf.shape[0]
    assert depth >= 1, "depth must be >= 1 (output undefined otherwise)"
    BN = B * N

    # Lane-dense feature dim (multiple of 128) and sublane-friendly row tile.
    Dp = _round_up(D, 128)
    tm = min(tile_m, _round_up(BN, 8))
    BNp = _round_up(BN, tm)

    x2d = x.reshape(BN, D)
    if BNp != BN or Dp != D:
        x2d = jnp.pad(x2d, ((0, BNp - BN), (0, Dp - D)))

    # Zero-pad params to Dp; weights in bf16 for native MXU rate (halves the
    # per-step weight DMA), biases stay f32.
    wf_p = jnp.pad(wf, ((0, 0), (0, Dp - D), (0, Dp - D))).astype(jnp.bfloat16)
    wg_p = jnp.pad(wg, ((0, 0), (0, Dp - D), (0, Dp - D))).astype(jnp.bfloat16)
    bf_p = jnp.pad(bf, ((0, 0), (0, 0), (0, Dp - D))).astype(jnp.float32)
    bg_p = jnp.pad(bg, ((0, 0), (0, 0), (0, Dp - D))).astype(jnp.float32)

    grid = (BNp // tm, depth)

    out2d = pl.pallas_call(
        reversible_kernel,
        out_shape=jax.ShapeDtypeStruct((BNp, Dp), x.dtype),
        grid_spec=pltpu.PrefetchScalarGridSpec(
            num_scalar_prefetch=0,
            grid=grid,
            in_specs=[
                # x row tile; pinned across the depth axis (seed at d == 0).
                pl.BlockSpec((tm, Dp), lambda i, d: (i, 0)),
                # Per-depth weights / biases (double-buffered by the pipeline).
                pl.BlockSpec((pl.Squeezed(), Dp, Dp), lambda i, d: (d, 0, 0)),
                pl.BlockSpec((pl.Squeezed(), 1, Dp), lambda i, d: (d, 0, 0)),
                pl.BlockSpec((pl.Squeezed(), Dp, Dp), lambda i, d: (d, 0, 0)),
                pl.BlockSpec((pl.Squeezed(), 1, Dp), lambda i, d: (d, 0, 0)),
            ],
            out_specs=pl.BlockSpec((tm, Dp), lambda i, d: (i, 0)),
            scratch_shapes=[
                pltpu.VMEM((tm, Dp), jnp.float32),  # x1 carry
                pltpu.VMEM((tm, Dp), jnp.float32),  # x2 carry
            ],
        ),
        compiler_params=pltpu.CompilerParams(
            dimension_semantics=("parallel", "arbitrary"),
            # Sized for v7x's 64 MiB VMEM (tile_m=512, D<=1024 fits with
            # ample headroom); also valid on v5e/v6e.
            vmem_limit_bytes=64 * 1024 * 1024,
        ),
    )(x2d, wf_p, bf_p, wg_p, bg_p)

    return out2d[:BN, :D].reshape(B, N, D)


def reversible_sequence_ref(x, wf, bf, wg, bg):
    """Pure-JAX f32 reference of the module's forward."""
    x1 = x.astype(jnp.float32)
    x2 = x.astype(jnp.float32)
    for d in range(wf.shape[0]):
        y1 = x1 + x2 @ wf[d] + bf[d]
        y2 = x2 + y1 @ wg[d] + bg[d]
        x1, x2 = y1, y2
    return ((x1 + x2) * 0.5).astype(x.dtype)


if __name__ == "__main__":
    key = jax.random.PRNGKey(0)
    B, N, D, depth = 2, 8, 32, 2

    k_x, k_wf, k_bf, k_wg, k_bg = jax.random.split(key, 5)
    x = jax.random.normal(k_x, (B, N, D), dtype=jnp.float32)
    # Deterministic Linear(D, D) weights for each block's f and g.
    scale = 1.0 / jnp.sqrt(D)
    wf = jax.random.normal(k_wf, (depth, D, D), dtype=jnp.float32) * scale
    bf = jax.random.normal(k_bf, (depth, 1, D), dtype=jnp.float32) * 0.1
    wg = jax.random.normal(k_wg, (depth, D, D), dtype=jnp.float32) * scale
    bg = jax.random.normal(k_bg, (depth, 1, D), dtype=jnp.float32) * 0.1

    out = reversible_sequence(x, wf, bf, wg, bg)
    out = jax.block_until_ready(out)

    ref = reversible_sequence_ref(x, wf, bf, wg, bg)
    assert out.shape == (B, N, D), out.shape
    # Kernel feeds the MXU bf16 operands (f32 accumulation), so compare to the
    # exact f32 reference with a bf16-operand-rounding tolerance.
    assert jnp.allclose(out, ref, atol=5e-2, rtol=5e-2), "mismatch vs reference"

    print("KERNEL_OK")
</pallas_src>

<mosaic_0001>
module attributes {stable_mosaic.version = 11 : i64} {
  func.func @reversible_kernel(%arg0: i32, %arg1: i32, %arg2: memref<16x128xf32, #tpu.memory_space<vmem>>, %arg3: memref<1x128x128xbf16, #tpu.memory_space<vmem>>, %arg4: memref<1x1x128xf32, #tpu.memory_space<vmem>>, %arg5: memref<1x128x128xbf16, #tpu.memory_space<vmem>>, %arg6: memref<1x1x128xf32, #tpu.memory_space<vmem>>, %arg7: memref<16x128xf32, #tpu.memory_space<vmem>>, %arg8: memref<16x128xf32, #tpu.memory_space<vmem>>, %arg9: memref<16x128xf32, #tpu.memory_space<vmem>>) attributes {dimension_semantics = [#tpu.dimension_semantics<parallel>, #tpu.dimension_semantics<arbitrary>], iteration_bounds = array<i64: 1, 2>, scalar_prefetch = 0 : i64, scratch_operands = 2 : i64, tpu.core_type = #tpu.core_type<tc>, window_params = [{transform_indices = @transform_0, window_bounds = array<i64: 16, 128>}, {transform_indices = @transform_1, window_bounds = array<i64: 1, 128, 128>}, {transform_indices = @transform_2, window_bounds = array<i64: 1, 1, 128>}, {transform_indices = @transform_3, window_bounds = array<i64: 1, 128, 128>}, {transform_indices = @transform_4, window_bounds = array<i64: 1, 1, 128>}, {transform_indices = @transform_5, window_bounds = array<i64: 16, 128>}]} {
    %c0_i32 = arith.constant 0 : i32
    %0 = arith.cmpi eq, %arg1, %c0_i32 : i32
    %1 = arith.extui %0 : i1 to i32
    %c0_i32_0 = arith.constant 0 : i32
    %2 = arith.cmpi ne, %1, %c0_i32_0 : i32
    scf.if %2 {
      %c0_22 = arith.constant 0 : index
      %c0_23 = arith.constant 0 : index
      %28 = vector.load %arg2[%c0_22, %c0_23] : memref<16x128xf32, #tpu.memory_space<vmem>>, vector<16x128xf32>
      %c0_24 = arith.constant 0 : index
      %c0_25 = arith.constant 0 : index
      %29 = vector.load %arg8[%c0_24, %c0_25] : memref<16x128xf32, #tpu.memory_space<vmem>>, vector<16x128xf32>
      tpu.vector_store %arg8[%c0_24, %c0_25], %28 {strides = array<i32>} : memref<16x128xf32, #tpu.memory_space<vmem>>, vector<16x128xf32>,
      %c0_26 = arith.constant 0 : index
      %c0_27 = arith.constant 0 : index
      %30 = vector.load %arg9[%c0_26, %c0_27] : memref<16x128xf32, #tpu.memory_space<vmem>>, vector<16x128xf32>
      tpu.vector_store %arg9[%c0_26, %c0_27], %28 {strides = array<i32>} : memref<16x128xf32, #tpu.memory_space<vmem>>, vector<16x128xf32>,
    } else {
    }
    %c0 = arith.constant 0 : index
    %c0_1 = arith.constant 0 : index
    %c0_2 = arith.constant 0 : index
    %3 = vector.load %arg3[%c0, %c0_1, %c0_2] : memref<1x128x128xbf16, #tpu.memory_space<vmem>>, vector<1x128x128xbf16>
    %4 = vector.shape_cast %3 : vector<1x128x128xbf16> to vector<128x128xbf16>
    %c0_3 = arith.constant 0 : index
    %c0_4 = arith.constant 0 : index
    %c0_5 = arith.constant 0 : index
    %5 = vector.load %arg4[%c0_3, %c0_4, %c0_5] : memref<1x1x128xf32, #tpu.memory_space<vmem>>, vector<1x1x128xf32>
    %6 = vector.shape_cast %5 : vector<1x1x128xf32> to vector<1x128xf32>
    %c0_6 = arith.constant 0 : index
    %c0_7 = arith.constant 0 : index
    %c0_8 = arith.constant 0 : index
    %7 = vector.load %arg5[%c0_6, %c0_7, %c0_8] : memref<1x128x128xbf16, #tpu.memory_space<vmem>>, vector<1x128x128xbf16>
    %8 = vector.shape_cast %7 : vector<1x128x128xbf16> to vector<128x128xbf16>
    %c0_9 = arith.constant 0 : index
    %c0_10 = arith.constant 0 : index
    %c0_11 = arith.constant 0 : index
    %9 = vector.load %arg6[%c0_9, %c0_10, %c0_11] : memref<1x1x128xf32, #tpu.memory_space<vmem>>, vector<1x1x128xf32>
    %10 = vector.shape_cast %9 : vector<1x1x128xf32> to vector<1x128xf32>
    %c0_12 = arith.constant 0 : index
    %c0_13 = arith.constant 0 : index
    %11 = vector.load %arg8[%c0_12, %c0_13] : memref<16x128xf32, #tpu.memory_space<vmem>>, vector<16x128xf32>
    %c0_14 = arith.constant 0 : index
    %c0_15 = arith.constant 0 : index
    %12 = vector.load %arg9[%c0_14, %c0_15] : memref<16x128xf32, #tpu.memory_space<vmem>>, vector<16x128xf32>
    %13 = arith.truncf %12 : vector<16x128xf32> to vector<16x128xbf16>
    %cst = arith.constant dense<0.000000e+00> : vector<16x128xf32>
    %14 = tpu.matmul %13, %4, %cst {dimension_numbers = #tpu.dot_dimension_numbers<[1], [0], [0], [1], [0, 0, 1, 1], [], []>} : vector<16x128xbf16>, vector<128x128xbf16>, vector<16x128xf32> -> vector<16x128xf32>
    %15 = arith.addf %11, %14 : vector<16x128xf32>
    %16 = vector.broadcast %6 : vector<1x128xf32> to vector<16x128xf32>
    %17 = arith.addf %15, %16 : vector<16x128xf32>
    %c0_16 = arith.constant 0 : index
    %c0_17 = arith.constant 0 : index
    %18 = vector.load %arg8[%c0_16, %c0_17] : memref<16x128xf32, #tpu.memory_space<vmem>>, vector<16x128xf32>
    tpu.vector_store %arg8[%c0_16, %c0_17], %17 {strides = array<i32>} : memref<16x128xf32, #tpu.memory_space<vmem>>, vector<16x128xf32>,
    %19 = arith.truncf %17 : vector<16x128xf32> to vector<16x128xbf16>
    %cst_18 = arith.constant dense<0.000000e+00> : vector<16x128xf32>
    %20 = tpu.matmul %19, %8, %cst_18 {dimension_numbers = #tpu.dot_dimension_numbers<[1], [0], [0], [1], [0, 0, 1, 1], [], []>} : vector<16x128xbf16>, vector<128x128xbf16>, vector<16x128xf32> -> vector<16x128xf32>
    %21 = arith.addf %12, %20 : vector<16x128xf32>
    %22 = vector.broadcast %10 : vector<1x128xf32> to vector<16x128xf32>
    %23 = arith.addf %21, %22 : vector<16x128xf32>
    %c0_19 = arith.constant 0 : index
    %c0_20 = arith.constant 0 : index
    %24 = vector.load %arg9[%c0_19, %c0_20] : memref<16x128xf32, #tpu.memory_space<vmem>>, vector<16x128xf32>
    tpu.vector_store %arg9[%c0_19, %c0_20], %23 {strides = array<i32>} : memref<16x128xf32, #tpu.memory_space<vmem>>, vector<16x128xf32>,
    %c1_i32 = arith.constant 1 : i32
    %25 = arith.cmpi eq, %arg1, %c1_i32 : i32
    %26 = arith.extui %25 : i1 to i32
    %c0_i32_21 = arith.constant 0 : i32
    %27 = arith.cmpi ne, %26, %c0_i32_21 : i32
    scf.if %27 {
      %28 = arith.addf %17, %23 : vector<16x128xf32>
      %cst_22 = arith.constant 5.000000e-01 : f32
      %29 = vector.broadcast %cst_22 : f32 to vector<16x128xf32>
      %30 = arith.mulf %28, %29 : vector<16x128xf32>
      %c0_23 = arith.constant 0 : index
      %c0_24 = arith.constant 0 : index
      %31 = vector.load %arg7[%c0_23, %c0_24] : memref<16x128xf32, #tpu.memory_space<vmem>>, vector<16x128xf32>
      tpu.vector_store %arg7[%c0_23, %c0_24], %30 {strides = array<i32>} : memref<16x128xf32, #tpu.memory_space<vmem>>, vector<16x128xf32>,
    } else {
    }
    return
  }
  func.func @transform_0(%arg0: i32, %arg1: i32) -> (i32, i32) {
    %c0_i32 = arith.constant 0 : i32
    %c0_i32_0 = arith.constant 0 : i32
    return %arg0, %c0_i32 : i32, i32
  }
  func.func @transform_1(%arg0: i32, %arg1: i32) -> (i32, i32, i32) {
    %c0_i32 = arith.constant 0 : i32
    %c0_i32_0 = arith.constant 0 : i32
    %c0_i32_1 = arith.constant 0 : i32
    return %arg1, %c0_i32, %c0_i32_0 : i32, i32, i32
  }
  func.func @transform_2(%arg0: i32, %arg1: i32) -> (i32, i32, i32) {
    %c0_i32 = arith.constant 0 : i32
    %c0_i32_0 = arith.constant 0 : i32
    %c0_i32_1 = arith.constant 0 : i32
    return %arg1, %c0_i32, %c0_i32_0 : i32, i32, i32
  }
  func.func @transform_3(%arg0: i32, %arg1: i32) -> (i32, i32, i32) {
    %c0_i32 = arith.constant 0 : i32
    %c0_i32_0 = arith.constant 0 : i32
    %c0_i32_1 = arith.constant 0 : i32
    return %arg1, %c0_i32, %c0_i32_0 : i32, i32, i32
  }
  func.func @transform_4(%arg0: i32, %arg1: i32) -> (i32, i32, i32) {
    %c0_i32 = arith.constant 0 : i32
    %c0_i32_0 = arith.constant 0 : i32
    %c0_i32_1 = arith.constant 0 : i32
    return %arg1, %c0_i32, %c0_i32_0 : i32, i32, i32
  }
  func.func @transform_5(%arg0: i32, %arg1: i32) -> (i32, i32) {
    %c0_i32 = arith.constant 0 : i32
    %c0_i32_0 = arith.constant 0 : i32
    return %arg0, %c0_i32 : i32, i32
  }
}

</mosaic_0001>

<llo_original>
// kernel: reversible_sequence.1
$region0: #{reversible_sequence.1}
  #allocation0 [shape = 'u32[]', space=smem, size = 0x4, offset = 0x4, fixed_abs, tag = 'smem constant byte address 0x4 - core index']
  #allocation1 [shape = 'u32[144,128]{1,0:T(1,128)}', space=vmem, size = 0x12000, scoped, tag = 'internal scratch']
  #allocation2 [shape = 'f32[16,128]{1,0:T(8,128)}', space=vmem, size = 0x2000, scoped, tag = 'scratch operand']
  #allocation3 [shape = 'f32[16,128]{1,0:T(8,128)}', space=vmem, size = 0x2000, scoped, tag = 'scratch operand']
  %s0 = inlined_call_operand.hbm [shape: f32[16,128], index: 0, kind: input, shape index: {}]
  %s1 = inlined_call_operand.hbm [shape: bf16[2,128,128], index: 1, kind: input, shape index: {}]
  %s2 = inlined_call_operand.hbm [shape: f32[2,1,128], index: 2, kind: input, shape index: {}]
  %s3 = inlined_call_operand.hbm [shape: bf16[2,128,128], index: 3, kind: input, shape index: {}]
  %s4 = inlined_call_operand.hbm [shape: f32[2,1,128], index: 4, kind: input, shape index: {}]
  %s5 = inlined_call_operand.hbm [shape: f32[16,128], index: 5, kind: output, shape index: {}]
  %s6 = sld [smem:[#allocation0]]
  $region81: #{reversible_sequence.1} parent=0
    _
  %s8 = ssub.s32 1, %s6
  %s9 = scalar_select 0, %s8, %s6
  $region1: #{reversible_sequence.1} parent=0
    #allocation4 [shape = 'u8[8192]{0}', space=vmem, size = 0x2000, scoped, tag = 'input window, operand 0, single buffered']
    #allocation5 [shape = 's32[2]{0}', space=sflag, size = 0x8, scoped, tag = 'scoped memory for reversible_sequence.1']
    #allocation6 [shape = 's32[2]{0}', space=sflag, size = 0x8, scoped, tag = 'scoped memory for reversible_sequence.1']
    #allocation7 [shape = 'u8[65536]{0}', space=vmem, size = 0x10000, scoped, tag = 'input window, operand 1']
    #allocation8 [shape = 's32[2]{0}', space=sflag, size = 0x8, scoped, tag = 'scoped memory for reversible_sequence.1']
    #allocation9 [shape = 'u8[1024]{0}', space=vmem, size = 0x400, scoped, tag = 'input window, operand 2']
    #allocation10 [shape = 'u8[65536]{0}', space=vmem, size = 0x10000, scoped, tag = 'input window, operand 3']
    #allocation11 [shape = 's32[2]{0}', space=sflag, size = 0x8, scoped, tag = 'scoped memory for reversible_sequence.1']
    #allocation12 [shape = 'u8[1024]{0}', space=vmem, size = 0x400, scoped, tag = 'input window, operand 4']
    #allocation13 [shape = 'u8[8192]{0}', space=vmem, size = 0x2000, scoped, tag = 'output window, operand 0, single buffered']
    %10 = vsyncpa [#allocation5], 0
    %11 = vsyncpa [#allocation8], 0
    %s12 = scalar_lea.sflag [#allocation8], 1
    %13 = vsyncpa %s12, 0
    %14 = vsyncpa [#allocation11], 0
    %s15 = scalar_lea.sflag [#allocation11], 1
    %16 = vsyncpa %s15, 0
    %17 = vsyncpa [#allocation6], 0
    loop: start=0, step=1, limit=4
    $region2: #{reversible_sequence.1} parent=1 // loop_pre_header
      _
    $region3: #{reversible_sequence.1} parent=1 // loop_header
      %s19 = sphi 0, %s23
      %p20 = scmp.ge.s32.totalorder %s19, 4
      %s26 = sphi 0, %s38
      %s27 = sphi 0, %s34
      %s28 = sphi 0, %s26
      %s29 = sphi 0, %s27
      %s30 = sphi 0, %s28
      %s31 = sphi 0, %s29
      %s41 = sphi 0, %s43
      %s44 = sphi 0, %s41
      %s45 = sphi 0, %s44
      %s61 = sphi 0, %s45
      %s67 = sphi 0, %s69
      %s70 = sphi 0, %s67
      %s71 = sphi 0, %s70
      %s87 = sphi 0, %s71
      %s93 = sphi 0, %s95
      %s96 = sphi 0, %s93
      %s97 = sphi 0, %s96
      %s113 = sphi 0, %s97
      %s119 = sphi 0, %s121
      %s122 = sphi 0, %s119
      %s123 = sphi 0, %s122
      %s139 = sphi 0, %s123
      %s145 = sphi 0, %s147
      %s148 = sphi 0, %s145
      %s149 = sphi 0, %s148
      %s165 = sphi 0, %s149
      %s171 = sphi 0, %s173
      %s174 = sphi 0, %s171
      %s175 = sphi 0, %s174
      %s191 = sphi 0, %s175
    $region4: #{reversible_sequence.1} parent=1 // loop_header_branch
      %22 = sbr.rel (%p20) target = $region8
    $region5: #{reversible_sequence.1} parent=1 // loop_body
      %s24 = ssub.s32 %s19, 1
      %s25 = ssub.s32 %s19, 2
      %s32 = sadd.s32 1, %s27
      %p33 = scmp.ge.s32.totalorder %s32, 2
      %s34 = scalar_select %p33, 0, %s32
      %s35 = sadd.s32 1, %s26
      %s36 = scalar_select %p33, %s35, %s26
      %p37 = scmp.ge.s32.totalorder %s36, 1
      %s38 = scalar_select %p37, 0, %s36
      %s39 = ssub.s32 %s26, %s38
      %p40 = scmp.eq.s32.totalorder %s39, 0
      %s42 = sadd.s32 %s41, 1
      %s43 = scalar_select %p40, %s41, %s42
      %p46 = pneg %p40
      %p47 = scmp.eq.s32.totalorder %s19, 1
      %p48 = por %p46, %p47
      %p49 = scmp.ne.s32.totalorder %s41, %s44
      %p50 = scmp.eq.s32.totalorder %s19, 0
      %p51 = por %p49, %p50
      %p52 = scmp.ne.s32.totalorder %s41, %s44
      %p53 = scmp.eq.s32.totalorder %s24, 1
      %p54 = por %p52, %p53
      %p55 = scmp.ne.s32.totalorder %s44, %s45
      %p56 = scmp.eq.s32.totalorder %s24, 0
      %p57 = por %p55, %p56
      %p58 = scmp.ne.s32.totalorder %s44, %s45
      %p59 = scmp.eq.s32.totalorder %s25, 1
      %p60 = por %p58, %p59
      %p62 = scmp.ne.s32.totalorder %s45, %s61
      %p63 = scmp.eq.s32.totalorder %s25, 0
      %p64 = por %p62, %p63
      %s65 = ssub.s32 %s27, %s34
      %p66 = scmp.eq.s32.totalorder %s65, 0
      %s68 = sadd.s32 %s67, 1
      %s69 = scalar_select %p66, %s67, %s68
      %p72 = pneg %p66
      %p73 = scmp.eq.s32.totalorder %s19, 1
      %p74 = por %p72, %p73
      %p75 = scmp.ne.s32.totalorder %s67, %s70
      %p76 = scmp.eq.s32.totalorder %s19, 0
      %p77 = por %p75, %p76
      %p78 = scmp.ne.s32.totalorder %s67, %s70
      %p79 = scmp.eq.s32.totalorder %s24, 1
      %p80 = por %p78, %p79
      %p81 = scmp.ne.s32.totalorder %s70, %s71
      %p82 = scmp.eq.s32.totalorder %s24, 0
      %p83 = por %p81, %p82
      %p84 = scmp.ne.s32.totalorder %s70, %s71
      %p85 = scmp.eq.s32.totalorder %s25, 1
      %p86 = por %p84, %p85
      %p88 = scmp.ne.s32.totalorder %s71, %s87
      %p89 = scmp.eq.s32.totalorder %s25, 0
      %p90 = por %p88, %p89
      %s91 = ssub.s32 %s27, %s34
      %p92 = scmp.eq.s32.totalorder %s91, 0
      %s94 = sadd.s32 %s93, 1
      %s95 = scalar_select %p92, %s93, %s94
      %p98 = pneg %p92
      %p99 = scmp.eq.s32.totalorder %s19, 1
      %p100 = por %p98, %p99
      %p101 = scmp.ne.s32.totalorder %s93, %s96
      %p102 = scmp.eq.s32.totalorder %s19, 0
      %p103 = por %p101, %p102
      %p104 = scmp.ne.s32.totalorder %s93, %s96
      %p105 = scmp.eq.s32.totalorder %s24, 1
      %p106 = por %p104, %p105
      %p107 = scmp.ne.s32.totalorder %s96, %s97
      %p108 = scmp.eq.s32.totalorder %s24, 0
      %p109 = por %p107, %p108
      %p110 = scmp.ne.s32.totalorder %s96, %s97
      %p111 = scmp.eq.s32.totalorder %s25, 1
      %p112 = por %p110, %p111
      %p114 = scmp.ne.s32.totalorder %s97, %s113
      %p115 = scmp.eq.s32.totalorder %s25, 0
      %p116 = por %p114, %p115
      %s117 = ssub.s32 %s27, %s34
      %p118 = scmp.eq.s32.totalorder %s117, 0
      %s120 = sadd.s32 %s119, 1
      %s121 = scalar_select %p118, %s119, %s120
      %p124 = pneg %p118
      %p125 = scmp.eq.s32.totalorder %s19, 1
      %p126 = por %p124, %p125
      %p127 = scmp.ne.s32.totalorder %s119, %s122
      %p128 = scmp.eq.s32.totalorder %s19, 0
      %p129 = por %p127, %p128
      %p130 = scmp.ne.s32.totalorder %s119, %s122
      %p131 = scmp.eq.s32.totalorder %s24, 1
      %p132 = por %p130, %p131
      %p133 = scmp.ne.s32.totalorder %s122, %s123
      %p134 = scmp.eq.s32.totalorder %s24, 0
      %p135 = por %p133, %p134
      %p136 = scmp.ne.s32.totalorder %s122, %s123
      %p137 = scmp.eq.s32.totalorder %s25, 1
      %p138 = por %p136, %p137
      %p140 = scmp.ne.s32.totalorder %s123, %s139
      %p141 = scmp.eq.s32.totalorder %s25, 0
      %p142 = por %p140, %p141
      %s143 = ssub.s32 %s27, %s34
      %p144 = scmp.eq.s32.totalorder %s143, 0
      %s146 = sadd.s32 %s145, 1
      %s147 = scalar_select %p144, %s145, %s146
      %p150 = pneg %p144
      %p151 = scmp.eq.s32.totalorder %s19, 1
      %p152 = por %p150, %p151
      %p153 = scmp.ne.s32.totalorder %s145, %s148
      %p154 = scmp.eq.s32.totalorder %s19, 0
      %p155 = por %p153, %p154
      %p156 = scmp.ne.s32.totalorder %s145, %s148
      %p157 = scmp.eq.s32.totalorder %s24, 1
      %p158 = por %p156, %p157
      %p159 = scmp.ne.s32.totalorder %s148, %s149
      %p160 = scmp.eq.s32.totalorder %s24, 0
      %p161 = por %p159, %p160
      %p162 = scmp.ne.s32.totalorder %s148, %s149
      %p163 = scmp.eq.s32.totalorder %s25, 1
      %p164 = por %p162, %p163
      %p166 = scmp.ne.s32.totalorder %s149, %s165
      %p167 = scmp.eq.s32.totalorder %s25, 0
      %p168 = por %p166, %p167
      %s169 = ssub.s32 %s26, %s38
      %p170 = scmp.eq.s32.totalorder %s169, 0
      %s172 = sadd.s32 %s171, 1
      %s173 = scalar_select %p170, %s171, %s172
      %p176 = pneg %p170
      %p177 = scmp.eq.s32.totalorder %s19, 1
      %p178 = por %p176, %p177
      %p179 = scmp.ne.s32.totalorder %s171, %s174
      %p180 = scmp.eq.s32.totalorder %s19, 0
      %p181 = por %p179, %p180
      %p182 = scmp.ne.s32.totalorder %s171, %s174
      %p183 = scmp.eq.s32.totalorder %s24, 1
      %p184 = por %p182, %p183
      %p185 = scmp.ne.s32.totalorder %s174, %s175
      %p186 = scmp.eq.s32.totalorder %s24, 0
      %p187 = por %p185, %p186
      %p188 = scmp.ne.s32.totalorder %s174, %s175
      %p189 = scmp.eq.s32.totalorder %s25, 1
      %p190 = por %p188, %p189
      %p192 = scmp.ne.s32.totalorder %s175, %s191
      %p193 = scmp.eq.s32.totalorder %s25, 0
      %p194 = por %p192, %p193
      %p195 = scmp.le.s32.totalorder 1, %s19
      %p196 = scmp.lt.s32.totalorder %s19, 3
      %p197 = pnand %p195, %p196
      %p198 = pneg %p197
      // Predicated region
      $region9: #{reversible_sequence.1} parent=5 // pred_check
        _
      $region10: #{reversible_sequence.1} parent=5 // pred_check_branch
        %200 = sbr.rel (%p197) target = $region12
      $region11: #{reversible_sequence.1} parent=5 // pred_region
        %s201 = ssub.s32 %s19, 1
        // Predicated region
        $region13: #{reversible_sequence.1} parent=11 // pred_check
          %p202 = pneg %p57
        $region14: #{reversible_sequence.1} parent=11 // pred_check_branch
          %204 = sbr.rel (%p202) target = $region16
        $region15: #{reversible_sequence.1} parent=11 // pred_region
          %s205 = smul.u32 2, %s28
          %s207 = ssub.s32 256, 256
          %208 = vsyncadd [#allocation5], %s207
          %s209 = smul.addr %s205, 128
          %s210 = scalar_lea.hbm %s0, %s209
          %s211 = sshll.u32 [#allocation4], 4
          %s212 = int_to_ptr.vmem [resolvable:$true] %s211
          %217 = dma.hbm_to_vmem [thread:$0]  %s210, 256, %s212, [#allocation5], 128, 128, 8
        $region16: #{reversible_sequence.1} parent=11 // pred_fallthru
          _
      $region12: #{reversible_sequence.1} parent=5 // pred_fallthru
        _
      %p218 = scmp.lt.s32.totalorder %s19, 2
      // Predicated region
      $region17: #{reversible_sequence.1} parent=5 // pred_check
        %p219 = pneg %p218
      $region18: #{reversible_sequence.1} parent=5 // pred_check_branch
        %221 = sbr.rel (%p219) target = $region20
      $region19: #{reversible_sequence.1} parent=5 // pred_region
        // Predicated region
        $region21: #{reversible_sequence.1} parent=19 // pred_check
          %p222 = pneg %p77
        $region22: #{reversible_sequence.1} parent=19 // pred_check_branch
          %224 = sbr.rel (%p222) target = $region24
        $region23: #{reversible_sequence.1} parent=19 // pred_region
          %s225 = sand.u32 %s19, 1
          %s226 = scalar_lea.sflag [#allocation8], %s225
          %s227 = sand.u32 %s67, 1
          %s228 = smul.addr %s227, 64
          %s229 = scalar_lea.vmem [#allocation7], %s228
          %s231 = ssub.s32 1024, 1024
          %232 = vsyncadd %s226, %s231
          %s233 = smul.addr %s27, 16
          %s234 = smul.addr %s233, 64
          %s235 = scalar_lea.hbm %s1, %s234
          %s236 = sshll.u32 %s229, 4
          %s237 = int_to_ptr.vmem [resolvable:$true] %s236
          %242 = dma.hbm_to_vmem [thread:$0]  %s235, 1024, %s237, %s226, 64, 64, 4
        $region24: #{reversible_sequence.1} parent=19 // pred_fallthru
          _
        // Predicated region
        $region25: #{reversible_sequence.1} parent=19 // pred_check
          %p243 = pneg %p103
        $region26: #{reversible_sequence.1} parent=19 // pred_check_branch
          %245 = sbr.rel (%p243) target = $region28
        $region27: #{reversible_sequence.1} parent=19 // pred_region
          %s246 = sand.u32 %s19, 1
          %s247 = scalar_lea.sflag [#allocation8], %s246
          %s248 = sand.u32 %s93, 1
          %s249 = scalar_lea.vmem [#allocation9], %s248
          %s251 = ssub.s32 16, 16
          %252 = vsyncadd %s247, %s251
          %s253 = smul.addr %s27, 16
          %s254 = scalar_lea.hbm %s2, %s253
          %s256 = sshll.u32 %s249, 4
          %s257 = int_to_ptr.vmem [resolvable:$true] %s256
          %259 = dma.hbm_to_vmem [thread:$0]  %s254, 16, %s257, %s247
        $region28: #{reversible_sequence.1} parent=19 // pred_fallthru
          _
        // Predicated region
        $region29: #{reversible_sequence.1} parent=19 // pred_check
          %p260 = pneg %p129
        $region30: #{reversible_sequence.1} parent=19 // pred_check_branch
          %262 = sbr.rel (%p260) target = $region32
        $region31: #{reversible_sequence.1} parent=19 // pred_region
          %s263 = sand.u32 %s19, 1
          %s264 = scalar_lea.sflag [#allocation11], %s263
          %s265 = sand.u32 %s119, 1
          %s266 = smul.addr %s265, 64
          %s267 = scalar_lea.vmem [#allocation10], %s266
          %s269 = ssub.s32 1024, 1024
          %270 = vsyncadd %s264, %s269
          %s271 = smul.addr %s27, 16
          %s272 = smul.addr %s271, 64
          %s273 = scalar_lea.hbm %s3, %s272
          %s274 = sshll.u32 %s267, 4
          %s275 = int_to_ptr.vmem [resolvable:$true] %s274
          %280 = dma.hbm_to_vmem [thread:$0]  %s273, 1024, %s275, %s264, 64, 64, 4
        $region32: #{reversible_sequence.1} parent=19 // pred_fallthru
          _
        // Predicated region
        $region33: #{reversible_sequence.1} parent=19 // pred_check
          %p281 = pneg %p155
        $region34: #{reversible_sequence.1} parent=19 // pred_check_branch
          %283 = sbr.rel (%p281) target = $region36
        $region35: #{reversible_sequence.1} parent=19 // pred_region
          %s284 = sand.u32 %s19, 1
          %s285 = scalar_lea.sflag [#allocation11], %s284
          %s286 = sand.u32 %s145, 1
          %s287 = scalar_lea.vmem [#allocation12], %s286
          %s289 = ssub.s32 16, 16
          %290 = vsyncadd %s285, %s289
          %s291 = smul.addr %s27, 16
          %s292 = scalar_lea.hbm %s4, %s291
          %s294 = sshll.u32 %s287, 4
          %s295 = int_to_ptr.vmem [resolvable:$true] %s294
          %297 = dma.hbm_to_vmem [thread:$0]  %s292, 16, %s295, %s285
        $region36: #{reversible_sequence.1} parent=19 // pred_fallthru
          _
      $region20: #{reversible_sequence.1} parent=5 // pred_fallthru
        _
      %p298 = scmp.le.s32.totalorder 1, %s19
      %p299 = scmp.lt.s32.totalorder %s19, 3
      %p300 = pnand %p298, %p299
      %p301 = pneg %p300
      // Predicated region
      $region37: #{reversible_sequence.1} parent=5 // pred_check
        _
      $region38: #{reversible_sequence.1} parent=5 // pred_check_branch
        %303 = sbr.rel (%p300) target = $region40
      $region39: #{reversible_sequence.1} parent=5 // pred_region
        %s304 = ssub.s32 %s19, 1
        // Predicated region
        $region41: #{reversible_sequence.1} parent=39 // pred_check
          %p305 = pneg %p57
        $region42: #{reversible_sequence.1} parent=39 // pred_check_branch
          %307 = sbr.rel (%p305) target = $region44
        $region43: #{reversible_sequence.1} parent=39 // pred_region
          %308 = dma.done [#allocation5], 256
        $region44: #{reversible_sequence.1} parent=39 // pred_fallthru
          _
        %s309 = sand.u32 %s24, 1
        %s310 = scalar_lea.sflag [#allocation8], %s309
        %s311 = sand.u32 %s70, 1
        %s312 = smul.addr %s311, 64
        %s313 = scalar_lea.vmem [#allocation7], %s312
        // Predicated region
        $region45: #{reversible_sequence.1} parent=39 // pred_check
          %p314 = pneg %p83
        $region46: #{reversible_sequence.1} parent=39 // pred_check_branch
          %316 = sbr.rel (%p314) target = $region48
        $region47: #{reversible_sequence.1} parent=39 // pred_region
          %317 = dma.done %s310, 1024
        $region48: #{reversible_sequence.1} parent=39 // pred_fallthru
          _
        %s318 = sand.u32 %s24, 1
        %s319 = scalar_lea.sflag [#allocation8], %s318
        %s320 = sand.u32 %s96, 1
        %s321 = scalar_lea.vmem [#allocation9], %s320
        // Predicated region
        $region49: #{reversible_sequence.1} parent=39 // pred_check
          %p322 = pneg %p109
        $region50: #{reversible_sequence.1} parent=39 // pred_check_branch
          %324 = sbr.rel (%p322) target = $region52
        $region51: #{reversible_sequence.1} parent=39 // pred_region
          %325 = dma.done %s319, 16
        $region52: #{reversible_sequence.1} parent=39 // pred_fallthru
          _
        %s326 = sand.u32 %s24, 1
        %s327 = scalar_lea.sflag [#allocation11], %s326
        %s328 = sand.u32 %s122, 1
        %s329 = smul.addr %s328, 64
        %s330 = scalar_lea.vmem [#allocation10], %s329
        // Predicated region
        $region53: #{reversible_sequence.1} parent=39 // pred_check
          %p331 = pneg %p135
        $region54: #{reversible_sequence.1} parent=39 // pred_check_branch
          %333 = sbr.rel (%p331) target = $region56
        $region55: #{reversible_sequence.1} parent=39 // pred_region
          %334 = dma.done %s327, 1024
        $region56: #{reversible_sequence.1} parent=39 // pred_fallthru
          _
        %s335 = sand.u32 %s24, 1
        %s336 = scalar_lea.sflag [#allocation11], %s335
        %s337 = sand.u32 %s148, 1
        %s338 = scalar_lea.vmem [#allocation12], %s337
        // Predicated region
        $region57: #{reversible_sequence.1} parent=39 // pred_check
          %p339 = pneg %p161
        $region58: #{reversible_sequence.1} parent=39 // pred_check_branch
          %341 = sbr.rel (%p339) target = $region60
        $region59: #{reversible_sequence.1} parent=39 // pred_region
          %342 = dma.done %s336, 16
        $region60: #{reversible_sequence.1} parent=39 // pred_fallthru
          _
        %p343 = pneg %p57
        %p344 = pneg %p54
        %s345 = sand.u32 %s24, 1
        %s346 = scalar_lea.sflag [#allocation8], %s345
        %s347 = sand.u32 %s70, 1
        %s348 = smul.addr %s347, 64
        %s349 = scalar_lea.vmem [#allocation7], %s348
        %p350 = pneg %p83
        %p351 = pneg %p80
        %s352 = sand.u32 %s24, 1
        %s353 = scalar_lea.sflag [#allocation8], %s352
        %s354 = sand.u32 %s96, 1
        %s355 = scalar_lea.vmem [#allocation9], %s354
        %p356 = pneg %p109
        %p357 = pneg %p106
        %s358 = sand.u32 %s24, 1
        %s359 = scalar_lea.sflag [#allocation11], %s358
        %s360 = sand.u32 %s122, 1
        %s361 = smul.addr %s360, 64
        %s362 = scalar_lea.vmem [#allocation10], %s361
        %p363 = pneg %p135
        %p364 = pneg %p132
        %s365 = sand.u32 %s24, 1
        %s366 = scalar_lea.sflag [#allocation11], %s365
        %s367 = sand.u32 %s148, 1
        %s368 = scalar_lea.vmem [#allocation12], %s367
        %p369 = pneg %p161
        %p370 = pneg %p158
        %p371 = pneg %p187
        %p372 = pneg %p184
        %s373 = smul.u32 2, %s28
        %s374 = smul.u32 2, %s28
        %p376 = scmp.eq.s32.totalorder %s29, 0
        // Predicated region
        $region61: #{reversible_sequence.1} parent=39 // pred_check
          %p377 = pneg %p376
        $region62: #{reversible_sequence.1} parent=39 // pred_check_branch
          %379 = sbr.rel (%p377) target = $region64
        $region63: #{reversible_sequence.1} parent=39 // pred_region
          %v380 = vld [vmem:[#allocation4] sm:$0xff]
          %v381 = vld [vmem:[#allocation4 + $0x8] sm:$0xff]
          %382 = vst [vmem:[#allocation2] sm:$0xff] %v380
          %383 = vst [vmem:[#allocation2 + $0x8] sm:$0xff] %v381
          %384 = vst [vmem:[#allocation3] sm:$0xff] %v380
          %385 = vst [vmem:[#allocation3 + $0x8] sm:$0xff] %v381
        $region64: #{reversible_sequence.1} parent=39 // pred_fallthru
          _
        %v386 = vld [vmem:[%s313] sm:$0xf]
        %v387 = vld [vmem:[%s313 + $0x4] sm:$0xf]
        %v388 = vld [vmem:[%s313 + $0x8] sm:$0xf]
        %v389 = vld [vmem:[%s313 + $0xc] sm:$0xf]
        %v390 = vld [vmem:[%s313 + $0x10] sm:$0xf]
        %v391 = vld [vmem:[%s313 + $0x14] sm:$0xf]
        %v392 = vld [vmem:[%s313 + $0x18] sm:$0xf]
        %v393 = vld [vmem:[%s313 + $0x1c] sm:$0xf]
        %v394 = vld [vmem:[%s313 + $0x20] sm:$0xf]
        %v395 = vld [vmem:[%s313 + $0x24] sm:$0xf]
        %v396 = vld [vmem:[%s313 + $0x28] sm:$0xf]
        %v397 = vld [vmem:[%s313 + $0x2c] sm:$0xf]
        %v398 = vld [vmem:[%s313 + $0x30] sm:$0xf]
        %v399 = vld [vmem:[%s313 + $0x34] sm:$0xf]
        %v400 = vld [vmem:[%s313 + $0x38] sm:$0xf]
        %v401 = vld [vmem:[%s313 + $0x3c] sm:$0xf]
        %v402 = vld [vmem:[%s321] sm:$0x1]
        %v403 = vld [vmem:[%s330] sm:$0xf]
        %v404 = vld [vmem:[%s330 + $0x4] sm:$0xf]
        %v405 = vld [vmem:[%s330 + $0x8] sm:$0xf]
        %v406 = vld [vmem:[%s330 + $0xc] sm:$0xf]
        %v407 = vld [vmem:[%s330 + $0x10] sm:$0xf]
        %v408 = vld [vmem:[%s330 + $0x14] sm:$0xf]
        %v409 = vld [vmem:[%s330 + $0x18] sm:$0xf]
        %v410 = vld [vmem:[%s330 + $0x1c] sm:$0xf]
        %v411 = vld [vmem:[%s330 + $0x20] sm:$0xf]
        %v412 = vld [vmem:[%s330 + $0x24] sm:$0xf]
        %v413 = vld [vmem:[%s330 + $0x28] sm:$0xf]
        %v414 = vld [vmem:[%s330 + $0x2c] sm:$0xf]
        %v415 = vld [vmem:[%s330 + $0x30] sm:$0xf]
        %v416 = vld [vmem:[%s330 + $0x34] sm:$0xf]
        %v417 = vld [vmem:[%s330 + $0x38] sm:$0xf]
        %v418 = vld [vmem:[%s330 + $0x3c] sm:$0xf]
        %v419 = vld [vmem:[%s338] sm:$0x1]
        %v420 = vld [vmem:[#allocation2] sm:$0xff]
        %v421 = vld [vmem:[#allocation2 + $0x8] sm:$0xff]
        %v422 = vld [vmem:[#allocation3] sm:$0xff]
        %v423 = vld [vmem:[#allocation3 + $0x8] sm:$0xff]
        %v424 = vpack.c.bf16 %v423, %v422
        %v441 = vunpack.c.l.b16 %v386
        %v442 = vunpack.c.l.b16 %v387
        %v443 = vunpack.c.l.b16 %v388
        %v444 = vunpack.c.l.b16 %v389
        %v445 = vunpack.c.l.b16 %v390
        %v446 = vunpack.c.l.b16 %v391
        %v447 = vunpack.c.l.b16 %v392
        %v448 = vunpack.c.l.b16 %v393
        %v449 = vunpack.c.l.b16 %v394
        %v450 = vunpack.c.l.b16 %v395
        %v451 = vunpack.c.l.b16 %v396
        %v452 = vunpack.c.l.b16 %v397
        %v453 = vunpack.c.l.b16 %v398
        %v454 = vunpack.c.l.b16 %v399
        %v455 = vunpack.c.l.b16 %v400
        %v456 = vunpack.c.l.b16 %v401
        %v457 = vpack.c.b16 %v442, %v441
        %v458 = vpack.c.b16 %v444, %v443
        %v459 = vpack.c.b16 %v446, %v445
        %v460 = vpack.c.b16 %v448, %v447
        %v461 = vpack.c.b16 %v450, %v449
        %v462 = vpack.c.b16 %v452, %v451
        %v463 = vpack.c.b16 %v454, %v453
        %v464 = vpack.c.b16 %v456, %v455
        %473 = vmatprep.subr.bf16.mxu0 0
        %474 = vmatpush1.bf16.msra.mxu0 %v457
        %475 = vmatprep.subr.bf16.mxu0 0
        %476 = vmatpush1.bf16.msra.mxu0 %v458
        %477 = vmatprep.subr.bf16.mxu0 0
        %478 = vmatpush1.bf16.msra.mxu0 %v459
        %479 = vmatprep.subr.bf16.mxu0 0
        %480 = vmatpush1.bf16.msra.mxu0 %v460
        %481 = vmatprep.subr.bf16.mxu0 0
        %482 = vmatpush1.bf16.msra.mxu0 %v461
        %483 = vmatprep.subr.bf16.mxu0 0
        %484 = vmatpush1.bf16.msra.mxu0 %v462
        %485 = vmatprep.subr.bf16.mxu0 0
        %486 = vmatpush1.bf16.msra.mxu0 %v463
        %487 = vmatprep.subr.bf16.mxu0 0
        %488 = vmatpush1.bf16.msra.mxu0 %v464
        %489 = vmatprep.subr.bf16.mxu0 0
        %490 = vmatpush1.bf16.msra.mxu0 0
        %491 = vmatprep.subr.bf16.mxu0 0
        %492 = vmatpush1.bf16.msra.mxu0 0
        %493 = vmatprep.subr.bf16.mxu0 0
        %494 = vmatpush1.bf16.msra.mxu0 0
        %495 = vmatprep.subr.bf16.mxu0 0
        %496 = vmatpush1.bf16.msra.mxu0 0
        %497 = vmatprep.subr.bf16.mxu0 0
        %498 = vmatpush1.bf16.msra.mxu0 0
        %499 = vmatprep.subr.bf16.mxu0 0
        %500 = vmatpush1.bf16.msra.mxu0 0
        %501 = vmatprep.subr.bf16.mxu0 0
        %502 = vmatpush1.bf16.msra.mxu0 0
        %503 = vmatprep.subr.bf16.mxu0 0
        %504 = vmatpush1.bf16.msra.mxu0 0
        %505 = vmatprep.mubr.bf16.mxu0 0
        %506 = vmatmul.mubr.bf16.gmra.mrb[0].mxu0 %v424
        %v507 = vpop.f32.mrb[0].mxu0
        %v508 = vadd.f32 0.0, %v507
        %v509 = vpop.f32.mrb[0].mxu0
        %v510 = vpop.f32.mrb[0].mxu0
        %v511 = vadd.f32 0.0, %v510
        %v512 = vpop.f32.mrb[0].mxu0
        %513 = vdwg.mxu0
        %v514 = vadd.f32 %v420, %v508
        %v515 = vadd.f32 %v421, %v511
        %v517 = vlaneseq
        %v518 = vshrl.u32 %v517, 7
        %v519 = vsub.s32 0, %v518
        %v520 = vrot.slane %v402, %v519
        %v522 = vadd.f32 %v514, %v520
        %v523 = vadd.f32 %v515, %v520
        %524 = vst [vmem:[#allocation2] sm:$0xff] %v522
        %525 = vst [vmem:[#allocation2 + $0x8] sm:$0xff] %v523
        %v526 = vpack.c.bf16 %v523, %v522
        %v543 = vunpack.c.l.b16 %v403
        %v544 = vunpack.c.l.b16 %v404
        %v545 = vunpack.c.l.b16 %v405
        %v546 = vunpack.c.l.b16 %v406
        %v547 = vunpack.c.l.b16 %v407
        %v548 = vunpack.c.l.b16 %v408
        %v549 = vunpack.c.l.b16 %v409
        %v550 = vunpack.c.l.b16 %v410
        %v551 = vunpack.c.l.b16 %v411
        %v552 = vunpack.c.l.b16 %v412
        %v553 = vunpack.c.l.b16 %v413
        %v554 = vunpack.c.l.b16 %v414
        %v555 = vunpack.c.l.b16 %v415
        %v556 = vunpack.c.l.b16 %v416
        %v557 = vunpack.c.l.b16 %v417
        %v558 = vunpack.c.l.b16 %v418
        %v559 = vpack.c.b16 %v544, %v543
        %v560 = vpack.c.b16 %v546, %v545
        %v561 = vpack.c.b16 %v548, %v547
        %v562 = vpack.c.b16 %v550, %v549
        %v563 = vpack.c.b16 %v552, %v551
        %v564 = vpack.c.b16 %v554, %v553
        %v565 = vpack.c.b16 %v556, %v555
        %v566 = vpack.c.b16 %v558, %v557
        %575 = vmatprep.subr.bf16.mxu0 0
        %576 = vmatpush1.bf16.msra.mxu0 %v559
        %577 = vmatprep.subr.bf16.mxu0 0
        %578 = vmatpush1.bf16.msra.mxu0 %v560
        %579 = vmatprep.subr.bf16.mxu0 0
        %580 = vmatpush1.bf16.msra.mxu0 %v561
        %581 = vmatprep.subr.bf16.mxu0 0
        %582 = vmatpush1.bf16.msra.mxu0 %v562
        %583 = vmatprep.subr.bf16.mxu0 0
        %584 = vmatpush1.bf16.msra.mxu0 %v563
        %585 = vmatprep.subr.bf16.mxu0 0
        %586 = vmatpush1.bf16.msra.mxu0 %v564
        %587 = vmatprep.subr.bf16.mxu0 0
        %588 = vmatpush1.bf16.msra.mxu0 %v565
        %589 = vmatprep.subr.bf16.mxu0 0
        %590 = vmatpush1.bf16.msra.mxu0 %v566
        %591 = vmatprep.subr.bf16.mxu0 0
        %592 = vmatpush1.bf16.msra.mxu0 0
        %593 = vmatprep.subr.bf16.mxu0 0
        %594 = vmatpush1.bf16.msra.mxu0 0
        %595 = vmatprep.subr.bf16.mxu0 0
        %596 = vmatpush1.bf16.msra.mxu0 0
        %597 = vmatprep.subr.bf16.mxu0 0
        %598 = vmatpush1.bf16.msra.mxu0 0
        %599 = vmatprep.subr.bf16.mxu0 0
        %600 = vmatpush1.bf16.msra.mxu0 0
        %601 = vmatprep.subr.bf16.mxu0 0
        %602 = vmatpush1.bf16.msra.mxu0 0
        %603 = vmatprep.subr.bf16.mxu0 0
        %604 = vmatpush1.bf16.msra.mxu0 0
        %605 = vmatprep.subr.bf16.mxu0 0
        %606 = vmatpush1.bf16.msra.mxu0 0
        %607 = vmatprep.mubr.bf16.mxu0 0
        %608 = vmatmul.mubr.bf16.gmra.mrb[0].mxu0 %v526
        %v609 = vpop.f32.mrb[0].mxu0
        %v610 = vadd.f32 0.0, %v609
        %v611 = vpop.f32.mrb[0].mxu0
        %v612 = vpop.f32.mrb[0].mxu0
        %v613 = vadd.f32 0.0, %v612
        %v614 = vpop.f32.mrb[0].mxu0
        %615 = vdwg.mxu0
        %v616 = vadd.f32 %v422, %v610
        %v617 = vadd.f32 %v423, %v613
        %v619 = vlaneseq
        %v620 = vshrl.u32 %v619, 7
        %v621 = vsub.s32 0, %v620
        %v622 = vrot.slane %v419, %v621
        %v624 = vadd.f32 %v616, %v622
        %v625 = vadd.f32 %v617, %v622
        %626 = vst [vmem:[#allocation3] sm:$0xff] %v624
        %627 = vst [vmem:[#allocation3 + $0x8] sm:$0xff] %v625
        %p628 = scmp.eq.s32.totalorder %s29, 1
        // Predicated region
        $region65: #{reversible_sequence.1} parent=39 // pred_check
          %p629 = pneg %p628
        $region66: #{reversible_sequence.1} parent=39 // pred_check_branch
          %631 = sbr.rel (%p629) target = $region68
        $region67: #{reversible_sequence.1} parent=39 // pred_region
          %v632 = vadd.f32 %v522, %v624
          %v633 = vadd.f32 %v523, %v625
          %v634 = vmul.f32 %v632, 0.5
          %v635 = vmul.f32 %v633, 0.5
          %636 = vst [vmem:[#allocation13] sm:$0xff] %v634
          %637 = vst [vmem:[#allocation13 + $0x8] sm:$0xff] %v635
        $region68: #{reversible_sequence.1} parent=39 // pred_fallthru
          _
        // Predicated region
        $region69: #{reversible_sequence.1} parent=39 // pred_check
          %p638 = pneg %p184
        $region70: #{reversible_sequence.1} parent=39 // pred_check_branch
          %640 = sbr.rel (%p638) target = $region72
        $region71: #{reversible_sequence.1} parent=39 // pred_region
          %s641 = smul.u32 2, %s28
          %s643 = ssub.s32 256, 256
          %644 = vsyncadd [#allocation6], %s643
          %s645 = smul.addr %s641, 128
          %s646 = scalar_lea.hbm %s5, %s645
          %s647 = sshll.u32 [#allocation13], 4
          %s648 = int_to_ptr.vmem [resolvable:$true] %s647
          %653 = dma.vmem_to_hbm [thread:$0]  %s648, 256, %s646, [#allocation6], 128, 128, 8
        $region72: #{reversible_sequence.1} parent=39 // pred_fallthru
          _
        // Predicated region
        $region73: #{reversible_sequence.1} parent=39 // pred_check
          %p654 = pneg %p184
        $region74: #{reversible_sequence.1} parent=39 // pred_check_branch
          %656 = sbr.rel (%p654) target = $region76
        $region75: #{reversible_sequence.1} parent=39 // pred_region
          %657 = dma.done [#allocation6], 256
        $region76: #{reversible_sequence.1} parent=39 // pred_fallthru
          _
      $region40: #{reversible_sequence.1} parent=5 // pred_fallthru
        _
      %p658 = scmp.le.s32.totalorder 2, %s19
      // Predicated region
      $region77: #{reversible_sequence.1} parent=5 // pred_check
        %p659 = pneg %p658
      $region78: #{reversible_sequence.1} parent=5 // pred_check_branch
        %661 = sbr.rel (%p659) target = $region80
      $region79: #{reversible_sequence.1} parent=5 // pred_region
        %s662 = ssub.s32 %s19, 2
      $region80: #{reversible_sequence.1} parent=5 // pred_fallthru
        _
    $region6: #{reversible_sequence.1} parent=1 // loop_footer
      %s23 = sadd.s32 1, %s19
    $region7: #{reversible_sequence.1} parent=1 // loop_footer_branch
      %18 = sbr.rel target = $region3
    $region8: #{reversible_sequence.1} parent=1 // loop_exit
      _
    %663 = vsyncpa [#allocation5], 1
    %s664 = scalar_lea.sflag [#allocation5], 1
    %665 = vsyncpa %s664, 1
    %666 = vsyncpa [#allocation8], 1
    %s667 = scalar_lea.sflag [#allocation8], 1
    %668 = vsyncpa %s667, 1
    %669 = vsyncpa [#allocation11], 1
    %s670 = scalar_lea.sflag [#allocation11], 1
    %671 = vsyncpa %s670, 1
    %672 = vsyncpa [#allocation6], 1
    %s673 = scalar_lea.sflag [#allocation6], 1
    %674 = vsyncpa %s673, 1

</llo_original>
